<compile_context>
chip_gen: v5e
topology: v5e:2x2
jax: 0.10.0
libtpu: 0.0.40
codegen_flags: <defaults>
</compile_context>

<pallas_src>
import jax
import jax.numpy as jnp
import numpy as np
from jax.experimental import pallas as pl
from jax.experimental.pallas import tpu as pltpu

# Label order (channel axis):
#   0: pe_present_on_image (image-level), 1..9: exam-level labels
EXAM_WEIGHTS = (
    0.0736196319, 0.09202453988, 0.1042944785, 0.1042944785, 0.1877300613,
    0.06257668712, 0.06257668712, 0.2346625767, 0.0782208589,
)
IMAGE_WEIGHT = 0.0736196319
SUM_EXAM_W = float(sum(EXAM_WEIGHTS))


def _bce(p, t):
    # torch.nn.BCELoss(reduction='none') clamps log outputs at -100.
    logp = jnp.maximum(jnp.log(p), -100.0)
    log1mp = jnp.maximum(jnp.log(1.0 - p), -100.0)
    return -(t * logp + (1.0 - t) * log1mp)


def rsna_loss_kernel(pred_ref, label_ref, mask_ref, out_ref, num_ref, den_ref):
    j = pl.program_id(0)

    @pl.when(j == 0)
    def _():
        num_ref[...] = jnp.zeros_like(num_ref)
        den_ref[...] = jnp.zeros_like(den_ref)

    pred = pred_ref[...]            # (Bt, C, L) f32, channels on sublanes
    label = label_ref[...]          # (Bt, C, L)
    mask = mask_ref[...]            # (Bt, 1, L) f32 {0,1} sequence mask

    # per-exam sequence lengths / validity recovered from the mask
    sl = jnp.sum(mask, axis=2)                          # (Bt, 1)
    batch_valid = (sl >= 1.0).astype(jnp.float32)       # (Bt, 1)
    inv_sl = 1.0 / jnp.maximum(sl, 1.0)                 # (Bt, 1)

    # masked per-channel means over the sequence (lane) axis
    mean_p = jnp.sum(pred * mask, axis=2) * inv_sl      # (Bt, C)
    mean_t = jnp.sum(label * mask, axis=2) * inv_sl     # (Bt, C)

    # --- exam loss: BCE of the masked means, channels 1..9, weighted ---
    bce_mean = _bce(mean_p, mean_t)                     # (Bt, C)  (tiny)
    col = jax.lax.broadcasted_iota(jnp.int32, bce_mean.shape, 1)
    w = jnp.zeros_like(bce_mean)
    for i, wi in enumerate(EXAM_WEIGHTS):               # weights baked in
        w = jnp.where(col == i + 1, wi, w)              # channel 0 stays 0
    exam_per_b = batch_valid * jnp.sum(bce_mean * w, axis=1,
                                       keepdims=True)   # (Bt, 1)

    # --- image loss: per-element BCE on channel 0 only (lane-dense) ---
    p0 = pred[:, 0:1, :]                                # (Bt, 1, L)
    t0 = label[:, 0:1, :]
    bce0_sum = jnp.sum(_bce(p0, t0) * mask, axis=2)     # (Bt, 1)
    img_w = IMAGE_WEIGHT * mean_t[:, 0:1]               # (Bt, 1)
    image_per_b = img_w * bce0_sum                      # (Bt, 1)

    # --- accumulate numerator / denominator across the batch grid ---
    num_ref[...] += jnp.sum(exam_per_b + image_per_b, keepdims=True)
    den_ref[...] += jnp.sum(SUM_EXAM_W * batch_valid + img_w * sl,
                            keepdims=True)

    @pl.when(j == pl.num_programs(0) - 1)
    def _():
        out_ref[...] = num_ref[...] / den_ref[...]


def rsna_loss(pred, label, seq_lens, *, vmem_block_budget_bytes=4 << 20):
    """pred, label: [B, L, C] float, seq_lens: [B] int. Returns scalar f32."""
    B, L, C = pred.shape
    assert C == 10, "RSNALoss expects 10 channels (1 image + 9 exam labels)"

    # lane-dense layout: sequence axis -> lanes
    pred_t = jnp.transpose(pred.astype(jnp.float32), (0, 2, 1))    # (B, C, L)
    label_t = jnp.transpose(label.astype(jnp.float32), (0, 2, 1))  # (B, C, L)
    mask = (jax.lax.broadcasted_iota(jnp.int32, (B, 1, L), 2)
            < seq_lens.astype(jnp.int32)[:, None, None]).astype(jnp.float32)

    # choose how many batch elements go into one grid step, keeping the
    # double-buffered, tile-padded blocks under a small VMEM budget
    # (safe for v5e's 16 MiB default scoped VMEM as well as v6e / v7x).
    l_pad = ((L + 127) // 128) * 128
    c_pad = ((C + 7) // 8) * 8
    bytes_per_batch = 4 * l_pad * (2 * c_pad + 8)      # pred + label + mask
    bt = int(max(1, min(B, vmem_block_budget_bytes // (2 * bytes_per_batch))))
    nb = -(-B // bt)
    b_pad = nb * bt
    if b_pad != B:                                     # pad batch if needed
        pad = b_pad - B
        pred_t = jnp.pad(pred_t, ((0, pad), (0, 0), (0, 0)),
                         constant_values=0.5)
        label_t = jnp.pad(label_t, ((0, pad), (0, 0), (0, 0)))
        mask = jnp.pad(mask, ((0, pad), (0, 0), (0, 0)))

    out = pl.pallas_call(
        rsna_loss_kernel,
        out_shape=jax.ShapeDtypeStruct((1, 1), jnp.float32),
        grid=(nb,),
        in_specs=[
            pl.BlockSpec((bt, C, L), lambda j: (j, 0, 0)),   # pred  (B,C,L)
            pl.BlockSpec((bt, C, L), lambda j: (j, 0, 0)),   # label (B,C,L)
            pl.BlockSpec((bt, 1, L), lambda j: (j, 0, 0)),   # seq-valid mask
        ],
        out_specs=pl.BlockSpec((1, 1), lambda j: (0, 0)),
        scratch_shapes=[
            pltpu.VMEM((1, 1), jnp.float32),   # numerator accumulator
            pltpu.VMEM((1, 1), jnp.float32),   # denominator accumulator
        ],
        # TODO(synk): a v7x-specific variant could emit per-step (num, den)
        # partials and mark the batch axis "parallel" for the 2 TensorCores;
        # with batch-per-step blocking the grid is typically 1-2 steps, so the
        # serial accumulator is kept for simplicity/portability.
        compiler_params=pltpu.CompilerParams(
            dimension_semantics=("arbitrary",)),
    )(pred_t, label_t, mask)
    return out[0, 0]


def rsna_loss_ref(pred, label, seq_lens):
    """Pure NumPy reference reproducing the PyTorch forward exactly."""
    pred = np.asarray(pred, dtype=np.float64)
    label = np.asarray(label, dtype=np.float64)
    seq_lens = list(np.asarray(seq_lens))

    def bce(p, t):
        return -(t * np.maximum(np.log(p), -100.0)
                 + (1.0 - t) * np.maximum(np.log(1.0 - p), -100.0))

    exam_loss = 0.0
    total_w = 0.0
    for i in range(9):
        for j in range(len(seq_lens)):
            sl = int(seq_lens[j])
            pm = pred[j, :sl, i + 1].mean()
            tm = label[j, :sl, i + 1].mean()
            exam_loss += bce(pm, tm) * EXAM_WEIGHTS[i]
            total_w += EXAM_WEIGHTS[i]
    image_loss = 0.0
    for j in range(len(seq_lens)):
        sl = int(seq_lens[j])
        w = IMAGE_WEIGHT * label[j, :sl, 0].mean()
        image_loss += (bce(pred[j, :sl, 0], label[j, :sl, 0]) * w).sum()
        total_w += w * sl
    return (exam_loss + image_loss) / total_w


if __name__ == "__main__":
    B, L, C = 2, 8, 10
    key = jax.random.PRNGKey(0)
    k1, k2 = jax.random.split(key)
    # pred: probabilities (post-sigmoid), label: {0,1} floats
    pred = jax.nn.sigmoid(jax.random.normal(k1, (B, L, C), dtype=jnp.float32))
    label = (jax.random.uniform(k2, (B, L, C)) > 0.5).astype(jnp.float32)
    seq_lens = jnp.array([6, 8], dtype=jnp.int32)

    loss = rsna_loss(pred, label, seq_lens)
    loss = jax.block_until_ready(loss)

    ref = rsna_loss_ref(pred, label, seq_lens)
    np.testing.assert_allclose(float(loss), float(ref), rtol=1e-4, atol=1e-5)
    print("KERNEL_OK")
</pallas_src>

<mosaic_0001>
module attributes {stable_mosaic.version = 11 : i64} {
  func.func @rsna_loss_kernel(%arg0: i32, %arg1: memref<2x10x8xf32, #tpu.memory_space<vmem>>, %arg2: memref<2x10x8xf32, #tpu.memory_space<vmem>>, %arg3: memref<2x1x8xf32, #tpu.memory_space<vmem>>, %arg4: memref<1x1xf32, #tpu.memory_space<vmem>>, %arg5: memref<1x1xf32, #tpu.memory_space<vmem>>, %arg6: memref<1x1xf32, #tpu.memory_space<vmem>>) attributes {dimension_semantics = [#tpu.dimension_semantics<arbitrary>], iteration_bounds = array<i64: 1>, scalar_prefetch = 0 : i64, scratch_operands = 2 : i64, tpu.core_type = #tpu.core_type<tc>, window_params = [{transform_indices = @transform_0, window_bounds = array<i64: 2, 10, 8>}, {transform_indices = @transform_1, window_bounds = array<i64: 2, 10, 8>}, {transform_indices = @transform_2, window_bounds = array<i64: 2, 1, 8>}, {pipeline_mode = #tpu.pipeline_mode<synchronous>, transform_indices = @transform_3, window_bounds = array<i64: 1, 1>}]} {
    %c0_i32 = arith.constant 0 : i32
    %0 = arith.cmpi eq, %arg0, %c0_i32 : i32
    %1 = arith.extui %0 : i1 to i32
    %c0_i32_0 = arith.constant 0 : i32
    %2 = arith.cmpi ne, %1, %c0_i32_0 : i32
    scf.if %2 {
      %cst_50 = arith.constant 0.000000e+00 : f32
      %129 = vector.broadcast %cst_50 : f32 to vector<1x1xf32>
      %c0_51 = arith.constant 0 : index
      %c0_52 = arith.constant 0 : index
      %130 = vector.load %arg5[%c0_51, %c0_52] : memref<1x1xf32, #tpu.memory_space<vmem>>, vector<1x1xf32>
      tpu.vector_store %arg5[%c0_51, %c0_52], %129 {strides = array<i32>} : memref<1x1xf32, #tpu.memory_space<vmem>>, vector<1x1xf32>,
      %cst_53 = arith.constant 0.000000e+00 : f32
      %131 = vector.broadcast %cst_53 : f32 to vector<1x1xf32>
      %c0_54 = arith.constant 0 : index
      %c0_55 = arith.constant 0 : index
      %132 = vector.load %arg6[%c0_54, %c0_55] : memref<1x1xf32, #tpu.memory_space<vmem>>, vector<1x1xf32>
      tpu.vector_store %arg6[%c0_54, %c0_55], %131 {strides = array<i32>} : memref<1x1xf32, #tpu.memory_space<vmem>>, vector<1x1xf32>,
    } else {
    }
    %c0 = arith.constant 0 : index
    %c0_1 = arith.constant 0 : index
    %c0_2 = arith.constant 0 : index
    %3 = vector.load %arg1[%c0, %c0_1, %c0_2] : memref<2x10x8xf32, #tpu.memory_space<vmem>>, vector<2x10x8xf32>
    %c0_3 = arith.constant 0 : index
    %c0_4 = arith.constant 0 : index
    %c0_5 = arith.constant 0 : index
    %4 = vector.load %arg2[%c0_3, %c0_4, %c0_5] : memref<2x10x8xf32, #tpu.memory_space<vmem>>, vector<2x10x8xf32>
    %c0_6 = arith.constant 0 : index
    %c0_7 = arith.constant 0 : index
    %c0_8 = arith.constant 0 : index
    %5 = vector.load %arg3[%c0_6, %c0_7, %c0_8] : memref<2x1x8xf32, #tpu.memory_space<vmem>>, vector<2x1x8xf32>
    %cst = arith.constant dense<0.000000e+00> : vector<2x1xf32>
    %6 = vector.multi_reduction <add>, %5, %cst [2] : vector<2x1x8xf32> to vector<2x1xf32>
    %cst_9 = arith.constant 1.000000e+00 : f32
    %7 = vector.broadcast %cst_9 : f32 to vector<2x1xf32>
    %8 = arith.cmpf oge, %6, %7 : vector<2x1xf32>
    %9 = arith.extui %8 : vector<2x1xi1> to vector<2x1xi32>
    %10 = arith.sitofp %9 : vector<2x1xi32> to vector<2x1xf32>
    %cst_10 = arith.constant 1.000000e+00 : f32
    %11 = vector.broadcast %cst_10 : f32 to vector<2x1xf32>
    %12 = arith.maximumf %6, %11 : vector<2x1xf32>
    %cst_11 = arith.constant 1.000000e+00 : f32
    %13 = vector.broadcast %cst_11 : f32 to vector<2x1xf32>
    %14 = arith.divf %13, %12 : vector<2x1xf32>
    %15 = vector.broadcast %5 : vector<2x1x8xf32> to vector<2x10x8xf32>
    %16 = arith.mulf %3, %15 : vector<2x10x8xf32>
    %cst_12 = arith.constant dense<0.000000e+00> : vector<2x10xf32>
    %17 = vector.multi_reduction <add>, %16, %cst_12 [2] : vector<2x10x8xf32> to vector<2x10xf32>
    %18 = vector.broadcast %14 : vector<2x1xf32> to vector<2x10xf32>
    %19 = arith.mulf %17, %18 : vector<2x10xf32>
    %20 = vector.broadcast %5 : vector<2x1x8xf32> to vector<2x10x8xf32>
    %21 = arith.mulf %4, %20 : vector<2x10x8xf32>
    %cst_13 = arith.constant dense<0.000000e+00> : vector<2x10xf32>
    %22 = vector.multi_reduction <add>, %21, %cst_13 [2] : vector<2x10x8xf32> to vector<2x10xf32>
    %23 = vector.broadcast %14 : vector<2x1xf32> to vector<2x10xf32>
    %24 = arith.mulf %22, %23 : vector<2x10xf32>
    %25 = math.log %19 : vector<2x10xf32>
    %cst_14 = arith.constant -1.000000e+02 : f32
    %26 = vector.broadcast %cst_14 : f32 to vector<2x10xf32>
    %27 = arith.maximumf %25, %26 : vector<2x10xf32>
    %cst_15 = arith.constant 1.000000e+00 : f32
    %28 = vector.broadcast %cst_15 : f32 to vector<2x10xf32>
    %29 = arith.subf %28, %19 : vector<2x10xf32>
    %30 = math.log %29 : vector<2x10xf32>
    %cst_16 = arith.constant -1.000000e+02 : f32
    %31 = vector.broadcast %cst_16 : f32 to vector<2x10xf32>
    %32 = arith.maximumf %30, %31 : vector<2x10xf32>
    %33 = arith.mulf %24, %27 : vector<2x10xf32>
    %cst_17 = arith.constant 1.000000e+00 : f32
    %34 = vector.broadcast %cst_17 : f32 to vector<2x10xf32>
    %35 = arith.subf %34, %24 : vector<2x10xf32>
    %36 = arith.mulf %35, %32 : vector<2x10xf32>
    %37 = arith.addf %33, %36 : vector<2x10xf32>
    %cst_18 = arith.constant 0.000000e+00 : f32
    %38 = vector.broadcast %cst_18 : f32 to vector<2x10xf32>
    %39 = arith.subf %38, %37 : vector<2x10xf32>
    %40 = tpu.iota {dimensions = array<i32: 1>} : vector<2x10xi32>
    %cst_19 = arith.constant 0.000000e+00 : f32
    %41 = vector.broadcast %cst_19 : f32 to vector<2x10xf32>
    %c1_i32 = arith.constant 1 : i32
    %42 = vector.broadcast %c1_i32 : i32 to vector<2x10xi32>
    %43 = arith.cmpi eq, %40, %42 : vector<2x10xi32>
    %cst_20 = arith.constant 0.0736196339 : f32
    %44 = vector.broadcast %cst_20 : f32 to vector<2x10xf32>
    %45 = arith.select %43, %44, %41 : vector<2x10xi1>, vector<2x10xf32>
    %c2_i32 = arith.constant 2 : i32
    %46 = vector.broadcast %c2_i32 : i32 to vector<2x10xi32>
    %47 = arith.cmpi eq, %40, %46 : vector<2x10xi32>
    %cst_21 = arith.constant 0.0920245423 : f32
    %48 = vector.broadcast %cst_21 : f32 to vector<2x10xf32>
    %49 = arith.select %47, %48, %45 : vector<2x10xi1>, vector<2x10xf32>
    %c3_i32 = arith.constant 3 : i32
    %50 = vector.broadcast %c3_i32 : i32 to vector<2x10xi32>
    %51 = arith.cmpi eq, %40, %50 : vector<2x10xi32>
    %cst_22 = arith.constant 0.104294479 : f32
    %52 = vector.broadcast %cst_22 : f32 to vector<2x10xf32>
    %53 = arith.select %51, %52, %49 : vector<2x10xi1>, vector<2x10xf32>
    %c4_i32 = arith.constant 4 : i32
    %54 = vector.broadcast %c4_i32 : i32 to vector<2x10xi32>
    %55 = arith.cmpi eq, %40, %54 : vector<2x10xi32>
    %cst_23 = arith.constant 0.104294479 : f32
    %56 = vector.broadcast %cst_23 : f32 to vector<2x10xf32>
    %57 = arith.select %55, %56, %53 : vector<2x10xi1>, vector<2x10xf32>
    %c5_i32 = arith.constant 5 : i32
    %58 = vector.broadcast %c5_i32 : i32 to vector<2x10xi32>
    %59 = arith.cmpi eq, %40, %58 : vector<2x10xi32>
    %cst_24 = arith.constant 0.187730059 : f32
    %60 = vector.broadcast %cst_24 : f32 to vector<2x10xf32>
    %61 = arith.select %59, %60, %57 : vector<2x10xi1>, vector<2x10xf32>
    %c6_i32 = arith.constant 6 : i32
    %62 = vector.broadcast %c6_i32 : i32 to vector<2x10xi32>
    %63 = arith.cmpi eq, %40, %62 : vector<2x10xi32>
    %cst_25 = arith.constant 0.0625766888 : f32
    %64 = vector.broadcast %cst_25 : f32 to vector<2x10xf32>
    %65 = arith.select %63, %64, %61 : vector<2x10xi1>, vector<2x10xf32>
    %c7_i32 = arith.constant 7 : i32
    %66 = vector.broadcast %c7_i32 : i32 to vector<2x10xi32>
    %67 = arith.cmpi eq, %40, %66 : vector<2x10xi32>
    %cst_26 = arith.constant 0.0625766888 : f32
    %68 = vector.broadcast %cst_26 : f32 to vector<2x10xf32>
    %69 = arith.select %67, %68, %65 : vector<2x10xi1>, vector<2x10xf32>
    %c8_i32 = arith.constant 8 : i32
    %70 = vector.broadcast %c8_i32 : i32 to vector<2x10xi32>
    %71 = arith.cmpi eq, %40, %70 : vector<2x10xi32>
    %cst_27 = arith.constant 0.234662578 : f32
    %72 = vector.broadcast %cst_27 : f32 to vector<2x10xf32>
    %73 = arith.select %71, %72, %69 : vector<2x10xi1>, vector<2x10xf32>
    %c9_i32 = arith.constant 9 : i32
    %74 = vector.broadcast %c9_i32 : i32 to vector<2x10xi32>
    %75 = arith.cmpi eq, %40, %74 : vector<2x10xi32>
    %cst_28 = arith.constant 0.0782208592 : f32
    %76 = vector.broadcast %cst_28 : f32 to vector<2x10xf32>
    %77 = arith.select %75, %76, %73 : vector<2x10xi1>, vector<2x10xf32>
    %78 = arith.mulf %39, %77 : vector<2x10xf32>
    %cst_29 = arith.constant dense<0.000000e+00> : vector<2xf32>
    %79 = vector.multi_reduction <add>, %78, %cst_29 [1] : vector<2x10xf32> to vector<2xf32>
    %80 = vector.shape_cast %79 : vector<2xf32> to vector<2x1xf32>
    %81 = arith.mulf %10, %80 : vector<2x1xf32>
    %82 = vector.extract_strided_slice %3 {offsets = [0, 0, 0], sizes = [2, 1, 8], strides = [1, 1, 1]} : vector<2x10x8xf32> to vector<2x1x8xf32>
    %83 = vector.extract_strided_slice %4 {offsets = [0, 0, 0], sizes = [2, 1, 8], strides = [1, 1, 1]} : vector<2x10x8xf32> to vector<2x1x8xf32>
    %84 = math.log %82 : vector<2x1x8xf32>
    %cst_30 = arith.constant -1.000000e+02 : f32
    %85 = vector.broadcast %cst_30 : f32 to vector<2x1x8xf32>
    %86 = arith.maximumf %84, %85 : vector<2x1x8xf32>
    %cst_31 = arith.constant 1.000000e+00 : f32
    %87 = vector.broadcast %cst_31 : f32 to vector<2x1x8xf32>
    %88 = arith.subf %87, %82 : vector<2x1x8xf32>
    %89 = math.log %88 : vector<2x1x8xf32>
    %cst_32 = arith.constant -1.000000e+02 : f32
    %90 = vector.broadcast %cst_32 : f32 to vector<2x1x8xf32>
    %91 = arith.maximumf %89, %90 : vector<2x1x8xf32>
    %92 = arith.mulf %83, %86 : vector<2x1x8xf32>
    %cst_33 = arith.constant 1.000000e+00 : f32
    %93 = vector.broadcast %cst_33 : f32 to vector<2x1x8xf32>
    %94 = arith.subf %93, %83 : vector<2x1x8xf32>
    %95 = arith.mulf %94, %91 : vector<2x1x8xf32>
    %96 = arith.addf %92, %95 : vector<2x1x8xf32>
    %cst_34 = arith.constant 0.000000e+00 : f32
    %97 = vector.broadcast %cst_34 : f32 to vector<2x1x8xf32>
    %98 = arith.subf %97, %96 : vector<2x1x8xf32>
    %99 = arith.mulf %98, %5 : vector<2x1x8xf32>
    %cst_35 = arith.constant dense<0.000000e+00> : vector<2x1xf32>
    %100 = vector.multi_reduction <add>, %99, %cst_35 [2] : vector<2x1x8xf32> to vector<2x1xf32>
    %101 = vector.extract_strided_slice %24 {offsets = [0, 0], sizes = [2, 1], strides = [1, 1]} : vector<2x10xf32> to vector<2x1xf32>
    %cst_36 = arith.constant 0.0736196339 : f32
    %102 = vector.broadcast %cst_36 : f32 to vector<2x1xf32>
    %103 = arith.mulf %102, %101 : vector<2x1xf32>
    %104 = arith.mulf %103, %100 : vector<2x1xf32>
    %c0_37 = arith.constant 0 : index
    %c0_38 = arith.constant 0 : index
    %105 = vector.load %arg5[%c0_37, %c0_38] : memref<1x1xf32, #tpu.memory_space<vmem>>, vector<1x1xf32>
    %106 = arith.addf %81, %104 : vector<2x1xf32>
    %107 = vector.shape_cast %106 : vector<2x1xf32> to vector<1x2x1xf32>
    %cst_39 = arith.constant dense<0.000000e+00> : vector<1xf32>
    %108 = vector.multi_reduction <add>, %107, %cst_39 [1, 2] : vector<1x2x1xf32> to vector<1xf32>
    %109 = vector.shape_cast %108 : vector<1xf32> to vector<1x1x1xf32>
    %110 = vector.extract %109[0, 0, 0] : f32 from vector<1x1x1xf32>
    %111 = vector.broadcast %110 : f32 to vector<1x1xf32>
    %112 = arith.addf %105, %111 : vector<1x1xf32>
    %c0_40 = arith.constant 0 : index
    %c0_41 = arith.constant 0 : index
    %113 = vector.load %arg5[%c0_40, %c0_41] : memref<1x1xf32, #tpu.memory_space<vmem>>, vector<1x1xf32>
    tpu.vector_store %arg5[%c0_40, %c0_41], %112 {strides = array<i32>} : memref<1x1xf32, #tpu.memory_space<vmem>>, vector<1x1xf32>,
    %c0_42 = arith.constant 0 : index
    %c0_43 = arith.constant 0 : index
    %114 = vector.load %arg6[%c0_42, %c0_43] : memref<1x1xf32, #tpu.memory_space<vmem>>, vector<1x1xf32>
    %cst_44 = arith.constant 1.000000e+00 : f32
    %115 = vector.broadcast %cst_44 : f32 to vector<2x1xf32>
    %116 = arith.mulf %115, %10 : vector<2x1xf32>
    %117 = arith.mulf %103, %6 : vector<2x1xf32>
    %118 = arith.addf %116, %117 : vector<2x1xf32>
    %119 = vector.shape_cast %118 : vector<2x1xf32> to vector<1x2x1xf32>
    %cst_45 = arith.constant dense<0.000000e+00> : vector<1xf32>
    %120 = vector.multi_reduction <add>, %119, %cst_45 [1, 2] : vector<1x2x1xf32> to vector<1xf32>
    %121 = vector.shape_cast %120 : vector<1xf32> to vector<1x1x1xf32>
    %122 = vector.extract %121[0, 0, 0] : f32 from vector<1x1x1xf32>
    %123 = vector.broadcast %122 : f32 to vector<1x1xf32>
    %124 = arith.addf %114, %123 : vector<1x1xf32>
    %c0_46 = arith.constant 0 : index
    %c0_47 = arith.constant 0 : index
    %125 = vector.load %arg6[%c0_46, %c0_47] : memref<1x1xf32, #tpu.memory_space<vmem>>, vector<1x1xf32>
    tpu.vector_store %arg6[%c0_46, %c0_47], %124 {strides = array<i32>} : memref<1x1xf32, #tpu.memory_space<vmem>>, vector<1x1xf32>,
    %c0_i32_48 = arith.constant 0 : i32
    %126 = arith.cmpi eq, %arg0, %c0_i32_48 : i32
    %127 = arith.extui %126 : i1 to i32
    %c0_i32_49 = arith.constant 0 : i32
    %128 = arith.cmpi ne, %127, %c0_i32_49 : i32
    scf.if %128 {
      %c0_50 = arith.constant 0 : index
      %c0_51 = arith.constant 0 : index
      %129 = vector.load %arg5[%c0_50, %c0_51] : memref<1x1xf32, #tpu.memory_space<vmem>>, vector<1x1xf32>
      %c0_52 = arith.constant 0 : index
      %c0_53 = arith.constant 0 : index
      %130 = vector.load %arg6[%c0_52, %c0_53] : memref<1x1xf32, #tpu.memory_space<vmem>>, vector<1x1xf32>
      %131 = arith.divf %129, %130 : vector<1x1xf32>
      %c0_54 = arith.constant 0 : index
      %c0_55 = arith.constant 0 : index
      %132 = vector.load %arg4[%c0_54, %c0_55] : memref<1x1xf32, #tpu.memory_space<vmem>>, vector<1x1xf32>
      tpu.vector_store %arg4[%c0_54, %c0_55], %131 {strides = array<i32>} : memref<1x1xf32, #tpu.memory_space<vmem>>, vector<1x1xf32>,
    } else {
    }
    return
  }
  func.func @transform_0(%arg0: i32) -> (i32, i32, i32) {
    %c0_i32 = arith.constant 0 : i32
    %c0_i32_0 = arith.constant 0 : i32
    %c0_i32_1 = arith.constant 0 : i32
    return %arg0, %c0_i32, %c0_i32_0 : i32, i32, i32
  }
  func.func @transform_1(%arg0: i32) -> (i32, i32, i32) {
    %c0_i32 = arith.constant 0 : i32
    %c0_i32_0 = arith.constant 0 : i32
    %c0_i32_1 = arith.constant 0 : i32
    return %arg0, %c0_i32, %c0_i32_0 : i32, i32, i32
  }
  func.func @transform_2(%arg0: i32) -> (i32, i32, i32) {
    %c0_i32 = arith.constant 0 : i32
    %c0_i32_0 = arith.constant 0 : i32
    %c0_i32_1 = arith.constant 0 : i32
    return %arg0, %c0_i32, %c0_i32_0 : i32, i32, i32
  }
  func.func @transform_3(%arg0: i32) -> (i32, i32) {
    %c0_i32 = arith.constant 0 : i32
    %c0_i32_0 = arith.constant 0 : i32
    %c0_i32_1 = arith.constant 0 : i32
    return %c0_i32, %c0_i32_0 : i32, i32
  }
}

</mosaic_0001>

<llo_original>
// kernel: tpu_custom_call.1
$region0: #{tpu_custom_call.1}
  #allocation0 [shape = 'u32[]', space=smem, size = 0x4, offset = 0x4, fixed_abs, tag = 'smem constant byte address 0x4 - core index']
  #allocation1 [shape = 'u32[72,128]{1,0:T(1,128)}', space=vmem, size = 0x9000, scoped, tag = 'internal scratch']
  #allocation2 [shape = 'f32[1,1]{1,0:T(1,128)}', space=vmem, size = 0x200, scoped, tag = 'scratch operand']
  #allocation3 [shape = 'f32[1,1]{1,0:T(1,128)}', space=vmem, size = 0x200, scoped, tag = 'scratch operand']
  %s0 = inlined_call_operand.vmem [shape: f32[2,10,8], index: 0, kind: input, shape index: {}]
  %s1 = inlined_call_operand.vmem [shape: f32[2,10,8], index: 1, kind: input, shape index: {}]
  %s2 = inlined_call_operand.vmem [shape: f32[2,1,8], index: 2, kind: input, shape index: {}]
  %s3 = inlined_call_operand.hbm [shape: f32[1,1], index: 3, kind: output, shape index: {}]
  %s4 = sld [smem:[#allocation0]]
  $region30: #{tpu_custom_call.1} parent=0
    _
  %s6 = ssub.s32 1, %s4
  %s7 = scalar_select 0, %s6, %s4
  $region1: #{tpu_custom_call.1} parent=0
    #allocation4 [shape = 'u8[512]{0}', space=vmem, size = 0x400, scoped, tag = 'output window, operand 0, single buffered']
    #allocation5 [shape = 's32[1]{0}', space=sflag, size = 0x4, scoped, tag = 'scoped memory for tpu_custom_call.1']
    %8 = vsyncpa [#allocation5], 0
    // Predicated region
    $region2: #{tpu_custom_call.1} parent=1 // pred_check
      _
    $region3: #{tpu_custom_call.1} parent=1 // pred_check_branch
      %10 = sbr.rel (0) target = $region5
    $region4: #{tpu_custom_call.1} parent=1 // pred_region
      _
    $region5: #{tpu_custom_call.1} parent=1 // pred_fallthru
      _
    // Predicated region
    $region6: #{tpu_custom_call.1} parent=1 // pred_check
      _
    $region7: #{tpu_custom_call.1} parent=1 // pred_check_branch
      %12 = sbr.rel (0) target = $region9
    $region8: #{tpu_custom_call.1} parent=1 // pred_region
      _
    $region9: #{tpu_custom_call.1} parent=1 // pred_fallthru
      _
    // Predicated region
    $region10: #{tpu_custom_call.1} parent=1 // pred_check
      _
    $region11: #{tpu_custom_call.1} parent=1 // pred_check_branch
      %14 = sbr.rel (0) target = $region13
    $region12: #{tpu_custom_call.1} parent=1 // pred_region
      _
    $region13: #{tpu_custom_call.1} parent=1 // pred_fallthru
      _
    %p15 = scmp.eq.s32.totalorder 0, 0
    // Predicated region
    $region14: #{tpu_custom_call.1} parent=1 // pred_check
      %p16 = pneg %p15
    $region15: #{tpu_custom_call.1} parent=1 // pred_check_branch
      %18 = sbr.rel (%p16) target = $region17
    $region16: #{tpu_custom_call.1} parent=1 // pred_region
      %vm19 = vcmask 0
      %20 = vst.msk [vmem:[#allocation2] sm:$0x1] %vm19, 0.0
      %21 = vst.msk [vmem:[#allocation3] sm:$0x1] %vm19, 0.0
    $region17: #{tpu_custom_call.1} parent=1 // pred_fallthru
      _
    %v22 = vld [vmem:[%s0] sm:$0xff]
    %v23 = vld [vmem:[%s0 + $0x8] sm:$0x3]
    %v24 = vld [vmem:[%s0 + $0x10] sm:$0xff]
    %v25 = vld [vmem:[%s0 + $0x18] sm:$0x3]
    %v26 = vld [vmem:[%s1] sm:$0xff]
    %v27 = vld [vmem:[%s1 + $0x8] sm:$0x3]
    %v28 = vld [vmem:[%s1 + $0x10] sm:$0xff]
    %v29 = vld [vmem:[%s1 + $0x18] sm:$0x3]
    %v30 = vld [vmem:[%s2] sm:$0x1]
    %v31 = vld [vmem:[%s2 + $0x1] sm:$0x1]
    %vm32 = vcmask 57344
    %v33 = vsel %vm32, %v30, 0.0
    %34 = vadd.xlane.f32.xlu0 %v33
    %v35 = vpop.xlane.xlu0 %34
    %v36 = vsel %vm32, %v31, 0.0
    %37 = vadd.xlane.f32.xlu0 %v36
    %v38 = vpop.xlane.xlu0 %37
    %vm39 = vcmp.ge.f32.partialorder %v35, 1.0
    %vm40 = vcmp.ge.f32.partialorder %v38, 1.0
    %v41 = vsel %vm39, 1, 0
    %v42 = vsel %vm40, 1, 0
    %v43 = vcvt.s32.f32 %v41
    %v44 = vcvt.s32.f32 %v42
    %v45 = vmax.f32 %v35, 1.0
    %v46 = vmax.f32 %v38, 1.0
    %v47 = vrcp.pop %v45
    %v48 = vmul.f32 %v45, %v47
    %v49 = vsub.f32 1.0, %v48
    %v50 = vmul.f32 %v47, %v49
    %v51 = vadd.f32 %v47, %v50
    %vm52 = vweird.f32 %v45
    %vm53 = vweird.f32 %v47
    %vm54 = vmor %vm52, %vm53
    %v55 = vsel %vm54, %v47, %v51
    %v56 = vand.u32 2147483647, %v45
    %vm57 = vcmp.eq.f32.partialorder %v56, 8.507059e+37
    %v58 = vand.u32 %v45, 2147483648
    %v59 = vor.u32 1.1754944e-38, %v58
    %v60 = vsel %vm57, %v59, %v55
    %v61 = vmul.f32 1.0, %v60
    %v62 = vrcp.pop %v46
    %v63 = vmul.f32 %v46, %v62
    %v64 = vsub.f32 1.0, %v63
    %v65 = vmul.f32 %v62, %v64
    %v66 = vadd.f32 %v62, %v65
    %vm67 = vweird.f32 %v46
    %vm68 = vweird.f32 %v62
    %vm69 = vmor %vm67, %vm68
    %v70 = vsel %vm69, %v62, %v66
    %v71 = vand.u32 2147483647, %v46
    %vm72 = vcmp.eq.f32.partialorder %v71, 8.507059e+37
    %v73 = vand.u32 %v46, 2147483648
    %v74 = vor.u32 1.1754944e-38, %v73
    %v75 = vsel %vm72, %v74, %v70
    %v76 = vmul.f32 1.0, %v75
    %v79 = vperm.slane %v30, 0
    %v80 = vperm.slane %v31, 0
    %v83 = vmul.f32 %v22, %v79
    %v84 = vmul.f32 %v23, %v79
    %v85 = vmul.f32 %v24, %v80
    %v86 = vmul.f32 %v25, %v80
    %vm87 = vcmask 64512
    %v88 = vsel %vm87, %v83, 0.0
    %89 = vadd.xlane.f32.xlu0 %v88
    %v90 = vpop.xlane.xlu0 %89
    %vm91 = vcmask 58368
    %v92 = vsel %vm91, %v84, 0.0
    %93 = vadd.xlane.f32.xlu0 %v92
    %v94 = vpop.xlane.xlu0 %93
    %v95 = vsel %vm87, %v85, 0.0
    %96 = vadd.xlane.f32.xlu0 %v95
    %v97 = vpop.xlane.xlu0 %96
    %v98 = vsel %vm91, %v86, 0.0
    %99 = vadd.xlane.f32.xlu0 %v98
    %v100 = vpop.xlane.xlu0 %99
    %v101 = vperm.slane %v61, 0
    %v102 = vperm.slane %v76, 0
    %v103 = vmul.f32 %v90, %v101
    %v104 = vmul.f32 %v94, %v101
    %v105 = vmul.f32 %v97, %v102
    %v106 = vmul.f32 %v100, %v102
    %v107 = vmul.f32 %v26, %v79
    %v108 = vmul.f32 %v27, %v79
    %v109 = vmul.f32 %v28, %v80
    %v110 = vmul.f32 %v29, %v80
    %v111 = vsel %vm87, %v107, 0.0
    %112 = vadd.xlane.f32.xlu0 %v111
    %v113 = vpop.xlane.xlu0 %112
    %v114 = vsel %vm91, %v108, 0.0
    %115 = vadd.xlane.f32.xlu0 %v114
    %v116 = vpop.xlane.xlu0 %115
    %v117 = vsel %vm87, %v109, 0.0
    %118 = vadd.xlane.f32.xlu0 %v117
    %v119 = vpop.xlane.xlu0 %118
    %v120 = vsel %vm91, %v110, 0.0
    %121 = vadd.xlane.f32.xlu0 %v120
    %v122 = vpop.xlane.xlu0 %121
    %v123 = vmul.f32 %v113, %v101
    %v124 = vmul.f32 %v116, %v101
    %v125 = vmul.f32 %v119, %v102
    %v126 = vmul.f32 %v122, %v102
    %v127 = vlog2.pop %v103
    %v128 = vmul.f32 %v127, 0.6931472
    %v129 = vlog2.pop %v104
    %v130 = vmul.f32 %v129, 0.6931472
    %v131 = vlog2.pop %v105
    %v132 = vmul.f32 %v131, 0.6931472
    %v133 = vlog2.pop %v106
    %v134 = vmul.f32 %v133, 0.6931472
    %v135 = vmax.f32 %v128, -100.0
    %v136 = vmax.f32 %v130, -100.0
    %v137 = vmax.f32 %v132, -100.0
    %v138 = vmax.f32 %v134, -100.0
    %v139 = vsub.f32 1.0, %v103
    %v140 = vsub.f32 1.0, %v104
    %v141 = vsub.f32 1.0, %v105
    %v142 = vsub.f32 1.0, %v106
    %v143 = vlog2.pop %v139
    %v144 = vmul.f32 %v143, 0.6931472
    %v145 = vlog2.pop %v140
    %v146 = vmul.f32 %v145, 0.6931472
    %v147 = vlog2.pop %v141
    %v148 = vmul.f32 %v147, 0.6931472
    %v149 = vlog2.pop %v142
    %v150 = vmul.f32 %v149, 0.6931472
    %v151 = vmax.f32 %v144, -100.0
    %v152 = vmax.f32 %v146, -100.0
    %v153 = vmax.f32 %v148, -100.0
    %v154 = vmax.f32 %v150, -100.0
    %v155 = vmul.f32 %v123, %v135
    %v156 = vmul.f32 %v124, %v136
    %v157 = vmul.f32 %v125, %v137
    %v158 = vmul.f32 %v126, %v138
    %v159 = vsub.f32 1.0, %v123
    %v160 = vsub.f32 1.0, %v124
    %v161 = vsub.f32 1.0, %v125
    %v162 = vsub.f32 1.0, %v126
    %v163 = vmul.f32 %v159, %v151
    %v164 = vmul.f32 %v160, %v152
    %v165 = vmul.f32 %v161, %v153
    %v166 = vmul.f32 %v162, %v154
    %v167 = vadd.f32 %v155, %v163
    %v168 = vadd.f32 %v156, %v164
    %v169 = vadd.f32 %v157, %v165
    %v170 = vadd.f32 %v158, %v166
    %v171 = vsub.f32 0.0, %v167
    %v172 = vsub.f32 0.0, %v168
    %v173 = vsub.f32 0.0, %v169
    %v174 = vsub.f32 0.0, %v170
    %v175 = vlaneseq
    %v176 = vand.u32 %v175, 127
    %vm177 = vcmp.eq.s32.totalorder %v176, 1
    %v178 = vsel %vm177, 0.073619634, 0.0
    %vm179 = vcmp.eq.s32.totalorder %v176, 2
    %v180 = vsel %vm179, 0.09202454, %v178
    %vm181 = vcmp.eq.s32.totalorder %v176, 3
    %v182 = vsel %vm181, 0.10429448, %v180
    %vm183 = vcmp.eq.s32.totalorder %v176, 4
    %v184 = vsel %vm183, 0.10429448, %v182
    %vm185 = vcmp.eq.s32.totalorder %v176, 5
    %v186 = vsel %vm185, 0.18773006, %v184
    %vm187 = vcmp.eq.s32.totalorder %v176, 6
    %v188 = vsel %vm187, 0.06257669, %v186
    %vm189 = vcmp.eq.s32.totalorder %v176, 7
    %v190 = vsel %vm189, 0.06257669, %v188
    %vm191 = vcmp.eq.s32.totalorder %v176, 8
    %v192 = vsel %vm191, 0.23466258, %v190
    %vm193 = vcmp.eq.s32.totalorder %v176, 9
    %v194 = vsel %vm193, 0.07822086, %v192
    %v196 = vlaneseq
    %v197 = vshrl.u32 %v196, 7
    %199 = vset.pattern.permute.xlu0 %v197
    %200 = vperm.xlu0 %199, %v194
    %v201 = vpop.permute.xlu0 %200
    %v202 = vlaneseq
    %v203 = vshrl.u32 %v202, 7
    %v204 = vadd.s32 %v203, 8
    %205 = vset.pattern.permute.xlu0 %v204
    %206 = vperm.xlu0 %205, %v194
    %v207 = vpop.permute.xlu0 %206
    %v210 = vmul.f32 %v171, %v201
    %v211 = vmul.f32 %v172, %v207
    %v212 = vmul.f32 %v173, %v201
    %v213 = vmul.f32 %v174, %v207
    %218 = vset.pattern.permute.xlu0 0
    %219 = vperm.xlu0 %218, %v210
    %v220 = vpop.permute.xlu0 %219
    %221 = vset.pattern.permute.xlu0 0
    %222 = vperm.xlu0 %221, %v211
    %v223 = vpop.permute.xlu0 %222
    %224 = vset.pattern.permute.xlu0 0
    %225 = vperm.xlu0 %224, %v212
    %v226 = vpop.permute.xlu0 %225
    %227 = vset.pattern.permute.xlu0 0
    %228 = vperm.xlu0 %227, %v213
    %v229 = vpop.permute.xlu0 %228
    %v230 = vperm.slane %v220, %v176
    %v231 = vadd.s32 %v176, 4294967288
    %v232 = vperm.slane %v223, %v231
    %vm233 = vcmask 130112
    %v234 = vsel %vm233, %v232, %v230
    %v235 = vperm.slane %v226, %v176
    %v236 = vperm.slane %v229, %v231
    %v237 = vsel %vm233, %v236, %v235
    %vm238 = vcmask 1041409
    %v239 = vsel %vm238, %v237, %v234
    %vm241 = vcmask 74752
    %v242 = vsel %vm241, %v239, 0.0
    %243 = vadd.xlane.f32.xlu0 %v242
    %v244 = vpop.xlane.xlu0 %243
    %v246 = vperm.slane %v244, 0
    %v247 = vperm.slane %v244, 1
    %v250 = vmul.f32 %v43, %v246
    %v251 = vmul.f32 %v44, %v247
    %v252 = vlog2.pop %v22
    %v253 = vmul.f32 %v252, 0.6931472
    %v254 = vlog2.pop %v24
    %v255 = vmul.f32 %v254, 0.6931472
    %v256 = vmax.f32 %v253, -100.0
    %v257 = vmax.f32 %v255, -100.0
    %v258 = vsub.f32 1.0, %v22
    %v259 = vsub.f32 1.0, %v24
    %v260 = vlog2.pop %v258
    %v261 = vmul.f32 %v260, 0.6931472
    %v262 = vlog2.pop %v259
    %v263 = vmul.f32 %v262, 0.6931472
    %v264 = vmax.f32 %v261, -100.0
    %v265 = vmax.f32 %v263, -100.0
    %v266 = vmul.f32 %v26, %v256
    %v267 = vmul.f32 %v28, %v257
    %v268 = vsub.f32 1.0, %v26
    %v269 = vsub.f32 1.0, %v28
    %v270 = vmul.f32 %v268, %v264
    %v271 = vmul.f32 %v269, %v265
    %v272 = vadd.f32 %v266, %v270
    %v273 = vadd.f32 %v267, %v271
    %v274 = vsub.f32 0.0, %v272
    %v275 = vsub.f32 0.0, %v273
    %v276 = vmul.f32 %v274, %v30
    %v277 = vmul.f32 %v275, %v31
    %v278 = vsel %vm32, %v276, 0.0
    %279 = vadd.xlane.f32.xlu0 %v278
    %v280 = vpop.xlane.xlu0 %279
    %v281 = vsel %vm32, %v277, 0.0
    %282 = vadd.xlane.f32.xlu0 %v281
    %v283 = vpop.xlane.xlu0 %282
    %v284 = vmul.f32 %v123, 0.073619634
    %v285 = vmul.f32 %v125, 0.073619634
    %v286 = vmul.f32 %v284, %v280
    %v287 = vmul.f32 %v285, %v283
    %v288 = vld [vmem:[#allocation2] sm:$0x1]
    %v289 = vadd.f32 %v250, %v286
    %v290 = vadd.f32 %v251, %v287
    %v293 = vrot.slane %v290, 7
    %v294 = vsel %vm238, %v293, %v289
    %vm296 = vcmask 1024
    %v297 = vsel %vm296, %v294, 0.0
    %298 = vadd.xlane.f32.xlu0 %v297
    %v299 = vpop.xlane.xlu0 %298
    %v300 = vrot.slane %v299, 4
    %v301 = vadd.f32 %v299, %v300
    %v302 = vrot.slane %v301, 2
    %v303 = vadd.f32 %v301, %v302
    %v304 = vrot.slane %v303, 1
    %v305 = vadd.f32 %v303, %v304
    %s306 = vtos %v305
    %v307 = vstv %s306
    %v308 = vadd.f32 %v288, %v307
    %vm309 = vcmask 0
    %310 = vst.msk [vmem:[#allocation2] sm:$0x1] %vm309, %v308
    %v311 = vld [vmem:[#allocation3] sm:$0x1]
    %v312 = vmul.f32 %v284, %v35
    %v313 = vmul.f32 %v285, %v38
    %v314 = vadd.f32 %v43, %v312
    %v315 = vadd.f32 %v44, %v313
    %v318 = vrot.slane %v315, 7
    %v319 = vsel %vm238, %v318, %v314
    %v321 = vsel %vm296, %v319, 0.0
    %322 = vadd.xlane.f32.xlu0 %v321
    %v323 = vpop.xlane.xlu0 %322
    %v324 = vrot.slane %v323, 4
    %v325 = vadd.f32 %v323, %v324
    %v326 = vrot.slane %v325, 2
    %v327 = vadd.f32 %v325, %v326
    %v328 = vrot.slane %v327, 1
    %v329 = vadd.f32 %v327, %v328
    %s330 = vtos %v329
    %v331 = vstv %s330
    %v332 = vadd.f32 %v311, %v331
    %333 = vst.msk [vmem:[#allocation3] sm:$0x1] %vm309, %v332
    // Predicated region
    $region18: #{tpu_custom_call.1} parent=1 // pred_check
      %p334 = pneg %p15
    $region19: #{tpu_custom_call.1} parent=1 // pred_check_branch
      %336 = sbr.rel (%p334) target = $region21
    $region20: #{tpu_custom_call.1} parent=1 // pred_region
      %v337 = vld [vmem:[#allocation2] sm:$0x1]
      %v338 = vld [vmem:[#allocation3] sm:$0x1]
      %v339 = vrcp.pop %v338
      %v340 = vmul.f32 %v338, %v339
      %v341 = vsub.f32 1.0, %v340
      %v342 = vmul.f32 %v339, %v341
      %v343 = vadd.f32 %v339, %v342
      %vm344 = vweird.f32 %v338
      %vm345 = vweird.f32 %v339
      %vm346 = vmor %vm344, %vm345
      %v347 = vsel %vm346, %v339, %v343
      %v348 = vand.u32 2147483647, %v338
      %vm349 = vcmp.eq.f32.partialorder %v348, 8.507059e+37
      %v350 = vand.u32 %v338, 2147483648
      %v351 = vor.u32 1.1754944e-38, %v350
      %v352 = vsel %vm349, %v351, %v347
      %v353 = vmul.f32 %v337, %v352
      %354 = vst.msk [vmem:[#allocation4] sm:$0x1] %vm309, %v353
    $region21: #{tpu_custom_call.1} parent=1 // pred_fallthru
      _
    // Predicated region
    $region22: #{tpu_custom_call.1} parent=1 // pred_check
      _
    $region23: #{tpu_custom_call.1} parent=1 // pred_check_branch
      %356 = sbr.rel (0) target = $region25
    $region24: #{tpu_custom_call.1} parent=1 // pred_region
      %358 = vsyncadd [#allocation5], 0
      %s360 = sshll.u32 [#allocation4], 4
      %s361 = int_to_ptr.vmem [resolvable:$true] %s360
      %s362 = sshll.u32 %s3, 4
      %s363 = int_to_ptr.hbm [resolvable:$true] %s362
      %365 = dma.vmem_to_hbm [thread:$0]  %s361, 16, %s363, [#allocation5]
    $region25: #{tpu_custom_call.1} parent=1 // pred_fallthru
      _
    // Predicated region
    $region26: #{tpu_custom_call.1} parent=1 // pred_check
      _
    $region27: #{tpu_custom_call.1} parent=1 // pred_check_branch
      %367 = sbr.rel (0) target = $region29
    $region28: #{tpu_custom_call.1} parent=1 // pred_region
      %369 = dma.done [#allocation5], 16
    $region29: #{tpu_custom_call.1} parent=1 // pred_fallthru
      _
    %370 = vsyncpa [#allocation5], 1

</llo_original>
